<compile_context>
chip_gen: v7x
topology: tpu7x:2x2x1
jax: 0.10.0
libtpu: 0.0.40
codegen_flags: <defaults>
</compile_context>

<pallas_src>
import numpy as np
import jax
import jax.numpy as jnp
from jax import lax
from jax.experimental import pallas as pl
from jax.experimental.pallas import tpu as pltpu  # noqa: F401  (TPU backend)

B, P = 2, 16                                # batch, points
BP = B * P                                  # batch folded into the point (sublane) axis
C_IN, C_MID1, C_MID2, C_OUT, GROUPS = 8, 4, 4, 8, 4
GC1, GC2 = GROUPS * C_MID1, GROUPS * C_MID2
RPAD = 8                                    # augmented geometry lanes: 3 xyz + |r|^2 + 1 + B mask + pad
LANES = 128                                 # lane-dense output width (C_OUT padded to 128)
MASK_PENALTY = 128.0                        # cross-batch d2 offset; exp(-128) == 0.0 exactly in f32
W_ROWS = C_IN + GC1 + GC2                   # packed weight slab rows (8 + 16 + 16 = 40)

assert C_IN == RPAD                         # lets x / rA / rB share one [3*BP, RPAD] input slab
assert 5 + B <= RPAD                        # xyz(3) + norm/one lanes(2) + one-hot batch lanes(B)

_TN = (((1,), (1,)), ((), ()))              # dot_general dims: contract last of both (A @ B^T)


def _swish(x):
    return x * jax.nn.sigmoid(x)


def depthwise_conv_parity_kernel(in_ref, w_ref, o_ref):
    """Single invocation over the whole problem (everything fits in VMEM).

    in_ref: [3*BP, RPAD]   rows 0:BP features, BP:2BP augmented rA, 2BP:3BP augmented rB
    w_ref:  [W_ROWS, 128]  rows 0:C_IN lin_in (cols 0:GC1); rows C_IN:C_IN+GC1 grouped conv
                           weight (block-diag, pre-scaled 1/sqrt(P), cols 0:GC2); last GC2 rows
                           lin_out zero-padded to 128 lanes (lane-dense store)
    o_ref:  [BP, 128]
    """
    x = in_ref[0:BP, :]                                                                # [BP, C_IN]
    rA = in_ref[BP:2 * BP, :]                                                          # [BP, RPAD]
    rB = in_ref[2 * BP:3 * BP, :]                                                      # [BP, RPAD]

    w_in = w_ref[0:C_IN, 0:GC1]                                                        # [C_IN, GC1]
    w_conv = w_ref[C_IN:C_IN + GC1, 0:GC2]                                             # [GC1, GC2]
    w_out = w_ref[C_IN + GC1:C_IN + GC1 + GC2, :]                                      # [GC2, 128]

    # lin_in + act_in (scalar gated block == swish)
    h = _swish(jnp.dot(x, w_in, preferred_element_type=jnp.float32))                   # [BP, GC1]

    # radial l=0 spatial kernel: one augmented-Gram MXU dot gives
    #   d2[a,b] = |r_a - r_b|^2 + 128 * [batch_a != batch_b]
    # (same-batch penalty lanes multiply to exact 0.0, so no accuracy contamination).
    d2 = lax.dot_general(rA, rB, _TN, preferred_element_type=jnp.float32)              # [BP, BP]
    K = jnp.exp(-jnp.maximum(d2, 0.0))            # cross-batch entries underflow to exactly 0

    # depthwise point convolution: spatial mix then grouped channel mix (block-diag weight,
    # 1/sqrt(P) already folded in at parameter-construction time)
    z = _swish(jnp.dot(jnp.dot(K, h, preferred_element_type=jnp.float32),
                       w_conv, preferred_element_type=jnp.float32))                    # [BP, GC2]

    # lin_out + act_out; padded lanes stay exactly 0 (swish(0) == 0) and are sliced off outside
    y = jnp.dot(z, w_out, preferred_element_type=jnp.float32)                          # [BP, 128]
    o_ref[...] = _swish(y).astype(o_ref.dtype)


@jax.jit
def depthwise_conv_parity(x, r, w_slab):
    xf = x.reshape(BP, C_IN)

    # Host-side augmented geometry (fused into the surrounding XLA program, tiny):
    #   rA = [-2x, -2y, -2z, |r|^2, 1, 128*onehot_b(batch), 0...]
    #   rB = [  x,   y,   z,   1, |r|^2, 1 - onehot_b(batch), 0...]
    sq = jnp.sum(r * r, axis=-1, keepdims=True)                                        # [B, P, 1]
    ones = jnp.ones((B, P, 1), jnp.float32)
    oh = jnp.broadcast_to(jnp.eye(B, dtype=jnp.float32)[:, None, :], (B, P, B))        # [B, P, B]
    pad = jnp.zeros((B, P, RPAD - 5 - B), jnp.float32)
    rA = jnp.concatenate([-2.0 * r, sq, ones, MASK_PENALTY * oh, pad], axis=-1)        # [B, P, RPAD]
    rB = jnp.concatenate([r, ones, sq, 1.0 - oh, pad], axis=-1)                        # [B, P, RPAD]

    # One input DMA: features + rA + rB sublane-stacked into a single slab.
    inp = jnp.concatenate(
        [xf, rA.reshape(BP, RPAD), rB.reshape(BP, RPAD)], axis=0)                      # [3*BP, RPAD]

    out = pl.pallas_call(
        depthwise_conv_parity_kernel,
        out_shape=jax.ShapeDtypeStruct((BP, LANES), jnp.float32),
        cost_estimate=pl.CostEstimate(flops=205_000, transcendentals=6_200,
                                      bytes_accessed=40_000),
    )(inp, w_slab)
    return out[:, :C_OUT].reshape(B, P, C_OUT)


def reference(x, r, w_in, w_conv_bd, w_out):
    h = _swish(x @ w_in)
    sq = jnp.sum(r * r, axis=-1, keepdims=True)
    d2 = sq + jnp.swapaxes(sq, -1, -2) - 2.0 * jnp.einsum("bpd,bqd->bpq", r, r)
    d2 = jnp.maximum(d2, 0.0)
    K = jnp.exp(-d2) / np.sqrt(P)
    z = _swish(jnp.einsum("bpq,bqc->bpc", K, h) @ w_conv_bd)
    return _swish(z @ w_out)


if __name__ == "__main__":
    key = jax.random.PRNGKey(0)
    kx, kr, k1, k2, k3 = jax.random.split(key, 5)

    x = jax.random.normal(kx, (B, P, C_IN), jnp.float32)        # features [..., point, channel]
    r = jax.random.normal(kr, (B, P, 3), jnp.float32)           # point geometry (xyz)

    # deterministic e3nn-style 1/sqrt(fan_in) normalized weights
    w_in = jax.random.normal(k1, (C_IN, GC1), jnp.float32) / np.sqrt(C_IN)
    w_conv = jax.random.normal(k2, (GROUPS, C_MID1, C_MID2), jnp.float32) / np.sqrt(C_MID1)
    w_out = jax.random.normal(k3, (GC2, C_OUT), jnp.float32) / np.sqrt(GC2)

    # grouped/depthwise channel weight as a block-diagonal matrix (dense is fine at this size)
    w_conv_bd = jnp.zeros((GC1, GC2), jnp.float32)
    for g in range(GROUPS):
        w_conv_bd = w_conv_bd.at[g * C_MID1:(g + 1) * C_MID1,
                                 g * C_MID2:(g + 1) * C_MID2].set(w_conv[g])

    # Parameter-construction-time packing for the kernel: fold the conv 1/sqrt(P) normalization,
    # zero-pad lin_out to 128 lanes, and stack all three weights into one [W_ROWS, 128] slab
    # (single weight DMA; static tile-aligned slices inside the kernel).
    w_slab = jnp.zeros((W_ROWS, LANES), jnp.float32)
    w_slab = w_slab.at[0:C_IN, 0:GC1].set(w_in)
    w_slab = w_slab.at[C_IN:C_IN + GC1, 0:GC2].set(w_conv_bd * (1.0 / np.sqrt(P)))
    w_slab = w_slab.at[C_IN + GC1:, 0:C_OUT].set(w_out)

    out = depthwise_conv_parity(x, r, w_slab)
    out = jax.block_until_ready(out)

    ref = reference(x, r, w_in, w_conv_bd, w_out)
    # Tolerance: the fused single-dot d2 differs from the reference's three-step construction
    # only by f32 accumulation-order rounding (~1e-6 level); 5e-5 leaves margin.
    np.testing.assert_allclose(np.asarray(out), np.asarray(ref), rtol=5e-5, atol=5e-5)
    print("KERNEL_OK")
</pallas_src>

<mosaic_0001>
module attributes {stable_mosaic.version = 11 : i64} {
  func.func @depthwise_conv_parity_kernel(%arg0: memref<96x8xf32, #tpu.memory_space<vmem>>, %arg1: memref<40x128xf32, #tpu.memory_space<vmem>>, %arg2: memref<32x128xf32, #tpu.memory_space<vmem>>) attributes {dimension_semantics = [], scalar_prefetch = 0 : i64, scratch_operands = 0 : i64, tpu.core_type = #tpu.core_type<tc>} {
    %c0 = arith.constant 0 : index
    %c0_0 = arith.constant 0 : index
    %0 = vector.load %arg0[%c0, %c0_0] : memref<96x8xf32, #tpu.memory_space<vmem>>, vector<32x8xf32>
    %c32 = arith.constant 32 : index
    %c0_1 = arith.constant 0 : index
    %1 = vector.load %arg0[%c32, %c0_1] : memref<96x8xf32, #tpu.memory_space<vmem>>, vector<32x8xf32>
    %c64 = arith.constant 64 : index
    %c0_2 = arith.constant 0 : index
    %2 = vector.load %arg0[%c64, %c0_2] : memref<96x8xf32, #tpu.memory_space<vmem>>, vector<32x8xf32>
    %c0_3 = arith.constant 0 : index
    %c0_4 = arith.constant 0 : index
    %3 = vector.load %arg1[%c0_3, %c0_4] : memref<40x128xf32, #tpu.memory_space<vmem>>, vector<8x16xf32>
    %c8 = arith.constant 8 : index
    %c0_5 = arith.constant 0 : index
    %4 = vector.load %arg1[%c8, %c0_5] : memref<40x128xf32, #tpu.memory_space<vmem>>, vector<16x16xf32>
    %c24 = arith.constant 24 : index
    %c0_6 = arith.constant 0 : index
    %5 = vector.load %arg1[%c24, %c0_6] : memref<40x128xf32, #tpu.memory_space<vmem>>, vector<16x128xf32>
    %cst = arith.constant dense<0.000000e+00> : vector<32x16xf32>
    %6 = tpu.matmul %0, %3, %cst {dimension_numbers = #tpu.dot_dimension_numbers<[1], [0], [0], [1], [0, 0, 1, 1], [], []>} : vector<32x8xf32>, vector<8x16xf32>, vector<32x16xf32> -> vector<32x16xf32>
    %7 = arith.negf %6 : vector<32x16xf32>
    %8 = math.exp %7 : vector<32x16xf32>
    %cst_7 = arith.constant 1.000000e+00 : f32
    %9 = vector.broadcast %cst_7 : f32 to vector<32x16xf32>
    %10 = arith.addf %9, %8 : vector<32x16xf32>
    %11 = arith.divf %9, %10 : vector<32x16xf32>
    %12 = arith.mulf %6, %11 : vector<32x16xf32>
    %cst_8 = arith.constant dense<0.000000e+00> : vector<32x32xf32>
    %13 = tpu.matmul %1, %2, %cst_8 {dimension_numbers = #tpu.dot_dimension_numbers<[1], [1], [0], [0], [0, 0, 1, 0], [], []>} : vector<32x8xf32>, vector<32x8xf32>, vector<32x32xf32> -> vector<32x32xf32>
    %cst_9 = arith.constant 0.000000e+00 : f32
    %14 = vector.broadcast %cst_9 : f32 to vector<32x32xf32>
    %15 = arith.maximumf %13, %14 : vector<32x32xf32>
    %cst_10 = arith.constant 0.000000e+00 : f32
    %16 = vector.broadcast %cst_10 : f32 to vector<32x32xf32>
    %17 = arith.subf %16, %15 : vector<32x32xf32>
    %18 = math.exp %17 : vector<32x32xf32>
    %cst_11 = arith.constant dense<0.000000e+00> : vector<32x16xf32>
    %19 = tpu.matmul %18, %12, %cst_11 {dimension_numbers = #tpu.dot_dimension_numbers<[1], [0], [0], [1], [0, 0, 1, 1], [], []>} : vector<32x32xf32>, vector<32x16xf32>, vector<32x16xf32> -> vector<32x16xf32>
    %cst_12 = arith.constant dense<0.000000e+00> : vector<32x16xf32>
    %20 = tpu.matmul %19, %4, %cst_12 {dimension_numbers = #tpu.dot_dimension_numbers<[1], [0], [0], [1], [0, 0, 1, 1], [], []>} : vector<32x16xf32>, vector<16x16xf32>, vector<32x16xf32> -> vector<32x16xf32>
    %21 = arith.negf %20 : vector<32x16xf32>
    %22 = math.exp %21 : vector<32x16xf32>
    %cst_13 = arith.constant 1.000000e+00 : f32
    %23 = vector.broadcast %cst_13 : f32 to vector<32x16xf32>
    %24 = arith.addf %23, %22 : vector<32x16xf32>
    %25 = arith.divf %23, %24 : vector<32x16xf32>
    %26 = arith.mulf %20, %25 : vector<32x16xf32>
    %cst_14 = arith.constant dense<0.000000e+00> : vector<32x128xf32>
    %27 = tpu.matmul %26, %5, %cst_14 {dimension_numbers = #tpu.dot_dimension_numbers<[1], [0], [0], [1], [0, 0, 1, 1], [], []>} : vector<32x16xf32>, vector<16x128xf32>, vector<32x128xf32> -> vector<32x128xf32>
    %28 = arith.negf %27 : vector<32x128xf32>
    %29 = math.exp %28 : vector<32x128xf32>
    %cst_15 = arith.constant 1.000000e+00 : f32
    %30 = vector.broadcast %cst_15 : f32 to vector<32x128xf32>
    %31 = arith.addf %30, %29 : vector<32x128xf32>
    %32 = arith.divf %30, %31 : vector<32x128xf32>
    %33 = arith.mulf %27, %32 : vector<32x128xf32>
    %c0_16 = arith.constant 0 : index
    %c0_17 = arith.constant 0 : index
    %34 = vector.load %arg2[%c0_16, %c0_17] : memref<32x128xf32, #tpu.memory_space<vmem>>, vector<32x128xf32>
    tpu.vector_store %arg2[%c0_16, %c0_17], %33 {strides = array<i32>} : memref<32x128xf32, #tpu.memory_space<vmem>>, vector<32x128xf32>,
    return
  }
}

</mosaic_0001>

<llo_original>
// kernel: depthwise_conv_parity.1
$region0: #{depthwise_conv_parity.1}
  #allocation0 [shape = 'u32[]', space=smem, size = 0x4, offset = 0x4, fixed_abs, tag = 'smem constant byte address 0x4 - core index']
  #allocation1 [shape = 'u32[144,128]{1,0:T(1,128)}', space=vmem, size = 0x12000, scoped, tag = 'internal scratch']
  %s0 = inlined_call_operand.vmem [shape: f32[96,8], index: 0, kind: input, shape index: {}]
  %s1 = inlined_call_operand.vmem [shape: f32[40,128], index: 1, kind: input, shape index: {}]
  %s2 = inlined_call_operand.vmem [shape: f32[32,128], index: 2, kind: output, shape index: {}]
  %s3 = sld [smem:[#allocation0]]
  $region18: #{depthwise_conv_parity.1} parent=0
    _
  %s5 = ssub.s32 1, %s3
  %s6 = scalar_select 0, %s5, %s3
  // Predicated region
  $region2: #{depthwise_conv_parity.1} parent=0 // pred_check
    _
  $region3: #{depthwise_conv_parity.1} parent=0 // pred_check_branch
    %8 = sbr.rel (0) target = $region5
  $region4: #{depthwise_conv_parity.1} parent=0 // pred_region
    _
  $region5: #{depthwise_conv_parity.1} parent=0 // pred_fallthru
    _
  // Predicated region
  $region6: #{depthwise_conv_parity.1} parent=0 // pred_check
    _
  $region7: #{depthwise_conv_parity.1} parent=0 // pred_check_branch
    %10 = sbr.rel (0) target = $region9
  $region8: #{depthwise_conv_parity.1} parent=0 // pred_region
    _
  $region9: #{depthwise_conv_parity.1} parent=0 // pred_fallthru
    _
  %v11 = vld [vmem:[%s0] sm:$0xff]
  %v12 = vld [vmem:[%s0 + $0x8] sm:$0xff]
  %v13 = vld [vmem:[%s0 + $0x10] sm:$0xff]
  %v14 = vld [vmem:[%s0 + $0x18] sm:$0xff]
  %v15 = vld [vmem:[%s0 + $0x20] sm:$0xff]
  %v16 = vld [vmem:[%s0 + $0x28] sm:$0xff]
  %v17 = vld [vmem:[%s0 + $0x30] sm:$0xff]
  %v18 = vld [vmem:[%s0 + $0x38] sm:$0xff]
  %v19 = vld [vmem:[%s0 + $0x40] sm:$0xff]
  %v20 = vld [vmem:[%s0 + $0x48] sm:$0xff]
  %v21 = vld [vmem:[%s0 + $0x50] sm:$0xff]
  %v22 = vld [vmem:[%s0 + $0x58] sm:$0xff]
  %v23 = vld [vmem:[%s1] sm:$0xff]
  %v24 = vld [vmem:[%s1 + $0x8] sm:$0xff]
  %v25 = vld [vmem:[%s1 + $0x10] sm:$0xff]
  %v26 = vld [vmem:[%s1 + $0x18] sm:$0xff]
  %v27 = vld [vmem:[%s1 + $0x20] sm:$0xff]
  %vm28 = vcmask 64512
  %v30 = vsel %vm28, %v11, 0
  %v33 = vsel %vm28, %v12, 0
  %v36 = vsel %vm28, %v13, 0
  %v39 = vsel %vm28, %v14, 0
  %41 = vmatprep.subr.mxu0 0.0
  %42 = vmatpush1.msra.mxu0 %v23
  %43 = vmatprep.subr.mxu0 0.0
  %44 = vmatpush1.msra.mxu0 0.0
  %45 = vmatprep.subr.mxu0 0.0
  %46 = vmatpush1.msra.mxu0 0.0
  %47 = vmatprep.subr.mxu0 0.0
  %48 = vmatpush1.msra.mxu0 0.0
  %49 = vmatprep.subr.mxu0 0.0
  %50 = vmatpush1.msra.mxu0 0.0
  %51 = vmatprep.subr.mxu0 0.0
  %52 = vmatpush1.msra.mxu0 0.0
  %53 = vmatprep.subr.mxu0 0.0
  %54 = vmatpush1.msra.mxu0 0.0
  %55 = vmatprep.subr.mxu0 0.0
  %56 = vmatpush1.msra.mxu0 0.0
  %57 = vmatprep.subr.mxu0 0.0
  %58 = vmatpush1.msra.mxu0 0.0
  %59 = vmatprep.subr.mxu0 0.0
  %60 = vmatpush1.msra.mxu0 0.0
  %61 = vmatprep.subr.mxu0 0.0
  %62 = vmatpush1.msra.mxu0 0.0
  %63 = vmatprep.subr.mxu0 0.0
  %64 = vmatpush1.msra.mxu0 0.0
  %65 = vmatprep.subr.mxu0 0.0
  %66 = vmatpush1.msra.mxu0 0.0
  %67 = vmatprep.subr.mxu0 0.0
  %68 = vmatpush1.msra.mxu0 0.0
  %69 = vmatprep.subr.mxu0 0.0
  %70 = vmatpush1.msra.mxu0 0.0
  %71 = vmatprep.subr.mxu0 0.0
  %72 = vmatpush1.msra.mxu0 0.0
  %73 = vmatprep.subr.mxu0 0.0
  %74 = vmatpush1.msra.mxu0 0.0
  %75 = vmatprep.subr.mxu0 0.0
  %76 = vmatpush1.msra.mxu0 0.0
  %77 = vmatprep.subr.mxu0 0.0
  %78 = vmatpush1.msra.mxu0 0.0
  %79 = vmatprep.subr.mxu0 0.0
  %80 = vmatpush1.msra.mxu0 0.0
  %81 = vmatprep.subr.mxu0 0.0
  %82 = vmatpush1.msra.mxu0 0.0
  %83 = vmatprep.subr.mxu0 0.0
  %84 = vmatpush1.msra.mxu0 0.0
  %85 = vmatprep.subr.mxu0 0.0
  %86 = vmatpush1.msra.mxu0 0.0
  %87 = vmatprep.subr.mxu0 0.0
  %88 = vmatpush1.msra.mxu0 0.0
  %89 = vmatprep.subr.mxu0 0.0
  %90 = vmatpush1.msra.mxu0 0.0
  %91 = vmatprep.subr.mxu0 0.0
  %92 = vmatpush1.msra.mxu0 0.0
  %93 = vmatprep.subr.mxu0 0.0
  %94 = vmatpush1.msra.mxu0 0.0
  %95 = vmatprep.subr.mxu0 0.0
  %96 = vmatpush1.msra.mxu0 0.0
  %97 = vmatprep.subr.mxu0 0.0
  %98 = vmatpush1.msra.mxu0 0.0
  %99 = vmatprep.subr.mxu0 0.0
  %100 = vmatpush1.msra.mxu0 0.0
  %101 = vmatprep.subr.mxu0 0.0
  %102 = vmatpush1.msra.mxu0 0.0
  %103 = vmatprep.subr.mxu0 0.0
  %104 = vmatpush1.msra.mxu0 0.0
  %105 = vmatprep.mubr.f32.mxu0 0.0
  %106 = vmatmul.mubr.f32.gmra.mrb[0].mxu0 %v30
  %v107 = vpop.f32.mrb[0].mxu0
  %v108 = vadd.f32 0.0, %v107
  %v109 = vpop.f32.mrb[0].mxu0
  %110 = vmatprep.mubr.f32.mxu0 0.0
  %111 = vmatmul.mubr.f32.gmra.mrb[0].mxu0 %v33
  %v112 = vpop.f32.mrb[0].mxu0
  %v113 = vadd.f32 0.0, %v112
  %v114 = vpop.f32.mrb[0].mxu0
  %115 = vmatprep.mubr.f32.mxu0 0.0
  %116 = vmatmul.mubr.f32.gmra.mrb[0].mxu0 %v36
  %v117 = vpop.f32.mrb[0].mxu0
  %v118 = vadd.f32 0.0, %v117
  %v119 = vpop.f32.mrb[0].mxu0
  %120 = vmatprep.mubr.f32.mxu0 0.0
  %121 = vmatmul.mubr.f32.gmra.mrb[0].mxu0 %v39
  %v122 = vpop.f32.mrb[0].mxu0
  %v123 = vadd.f32 0.0, %v122
  %v124 = vpop.f32.mrb[0].mxu0
  %125 = vdwg.mxu0
  %v126 = vxor.u32 %v108, 2147483648
  %v127 = vxor.u32 %v113, 2147483648
  %v128 = vxor.u32 %v118, 2147483648
  %v129 = vxor.u32 %v123, 2147483648
  %v130 = vmul.f32 %v126, 1.442695
  %v131 = vpow.pop %v130
  %v132 = vmul.f32 %v127, 1.442695
  %v133 = vpow.pop %v132
  %v134 = vmul.f32 %v128, 1.442695
  %v135 = vpow.pop %v134
  %v136 = vmul.f32 %v129, 1.442695
  %v137 = vpow.pop %v136
  %v138 = vadd.f32 %v131, 1.0
  %v139 = vadd.f32 %v133, 1.0
  %v140 = vadd.f32 %v135, 1.0
  %v141 = vadd.f32 %v137, 1.0
  %v142 = vrcp.pop %v138
  %v143 = vmul.f32 1.0, %v142
  %v144 = vrcp.pop %v139
  %v145 = vmul.f32 1.0, %v144
  %v146 = vrcp.pop %v140
  %v147 = vmul.f32 1.0, %v146
  %v148 = vrcp.pop %v141
  %v149 = vmul.f32 1.0, %v148
  %v150 = vmul.f32 %v108, %v143
  %v151 = vmul.f32 %v113, %v145
  %v152 = vmul.f32 %v118, %v147
  %v153 = vmul.f32 %v123, %v149
  %v155 = vsel %vm28, %v15, 0
  %v158 = vsel %vm28, %v16, 0
  %v161 = vsel %vm28, %v17, 0
  %v164 = vsel %vm28, %v18, 0
  %v167 = vsel %vm28, %v19, 0
  %v170 = vsel %vm28, %v20, 0
  %v173 = vsel %vm28, %v21, 0
  %v176 = vsel %vm28, %v22, 0
  %178 = vmatprep.subr.mxu0 0.0
  %179 = vmatpush1.xpose.msra.mxu0 %v167
  %180 = vmatprep.subr.mxu0 0.0
  %181 = vmatpush1.xpose.msra.mxu0 %v170
  %182 = vmatprep.subr.mxu0 0.0
  %183 = vmatpush1.xpose.msra.mxu0 %v173
  %184 = vmatprep.subr.mxu0 0.0
  %185 = vmatpush1.xpose.msra.mxu0 %v176
  %186 = vmatprep.subr.mxu0 0.0
  %187 = vmatpush1.xpose.msra.mxu0 0.0
  %188 = vmatprep.subr.mxu0 0.0
  %189 = vmatpush1.xpose.msra.mxu0 0.0
  %190 = vmatprep.subr.mxu0 0.0
  %191 = vmatpush1.xpose.msra.mxu0 0.0
  %192 = vmatprep.subr.mxu0 0.0
  %193 = vmatpush1.xpose.msra.mxu0 0.0
  %194 = vmatprep.subr.mxu0 0.0
  %195 = vmatpush1.xpose.msra.mxu0 0.0
  %196 = vmatprep.subr.mxu0 0.0
  %197 = vmatpush1.xpose.msra.mxu0 0.0
  %198 = vmatprep.subr.mxu0 0.0
  %199 = vmatpush1.xpose.msra.mxu0 0.0
  %200 = vmatprep.subr.mxu0 0.0
  %201 = vmatpush1.xpose.msra.mxu0 0.0
  %202 = vmatprep.subr.mxu0 0.0
  %203 = vmatpush1.xpose.msra.mxu0 0.0
  %204 = vmatprep.subr.mxu0 0.0
  %205 = vmatpush1.xpose.msra.mxu0 0.0
  %206 = vmatprep.subr.mxu0 0.0
  %207 = vmatpush1.xpose.msra.mxu0 0.0
  %208 = vmatprep.subr.mxu0 0.0
  %209 = vmatpush1.xpose.msra.mxu0 0.0
  %210 = vmatprep.subr.mxu0 0.0
  %211 = vmatpush1.xpose.msra.mxu0 0.0
  %212 = vmatprep.subr.mxu0 0.0
  %213 = vmatpush1.xpose.msra.mxu0 0.0
  %214 = vmatprep.subr.mxu0 0.0
  %215 = vmatpush1.xpose.msra.mxu0 0.0
  %216 = vmatprep.subr.mxu0 0.0
  %217 = vmatpush1.xpose.msra.mxu0 0.0
  %218 = vmatprep.subr.mxu0 0.0
  %219 = vmatpush1.xpose.msra.mxu0 0.0
  %220 = vmatprep.subr.mxu0 0.0
  %221 = vmatpush1.xpose.msra.mxu0 0.0
  %222 = vmatprep.subr.mxu0 0.0
  %223 = vmatpush1.xpose.msra.mxu0 0.0
  %224 = vmatprep.subr.mxu0 0.0
  %225 = vmatpush1.xpose.msra.mxu0 0.0
  %226 = vmatprep.subr.mxu0 0.0
  %227 = vmatpush1.xpose.msra.mxu0 0.0
  %228 = vmatprep.subr.mxu0 0.0
  %229 = vmatpush1.xpose.msra.mxu0 0.0
  %230 = vmatprep.subr.mxu0 0.0
  %231 = vmatpush1.xpose.msra.mxu0 0.0
  %232 = vmatprep.subr.mxu0 0.0
  %233 = vmatpush1.xpose.msra.mxu0 0.0
  %234 = vmatprep.subr.mxu0 0.0
  %235 = vmatpush1.xpose.msra.mxu0 0.0
  %236 = vmatprep.subr.mxu0 0.0
  %237 = vmatpush1.xpose.msra.mxu0 0.0
  %238 = vmatprep.subr.mxu0 0.0
  %239 = vmatpush1.xpose.msra.mxu0 0.0
  %240 = vmatprep.subr.mxu0 0.0
  %241 = vmatpush1.xpose.msra.mxu0 0.0
  %242 = vmatprep.mubr.f32.mxu0 0.0
  %243 = vmatmul.mubr.f32.gmra.mrb[0].mxu0 %v155
  %v244 = vpop.f32.mrb[0].mxu0
  %v245 = vadd.f32 0.0, %v244
  %v246 = vpop.f32.mrb[0].mxu0
  %247 = vmatprep.mubr.f32.mxu0 0.0
  %248 = vmatmul.mubr.f32.gmra.mrb[0].mxu0 %v158
  %v249 = vpop.f32.mrb[0].mxu0
  %v250 = vadd.f32 0.0, %v249
  %v251 = vpop.f32.mrb[0].mxu0
  %252 = vmatprep.mubr.f32.mxu0 0.0
  %253 = vmatmul.mubr.f32.gmra.mrb[0].mxu0 %v161
  %v254 = vpop.f32.mrb[0].mxu0
  %v255 = vadd.f32 0.0, %v254
  %v256 = vpop.f32.mrb[0].mxu0
  %257 = vmatprep.mubr.f32.mxu0 0.0
  %258 = vmatmul.mubr.f32.gmra.mrb[0].mxu0 %v164
  %v259 = vpop.f32.mrb[0].mxu0
  %v260 = vadd.f32 0.0, %v259
  %v261 = vpop.f32.mrb[0].mxu0
  %262 = vdwg.mxu0
  %v263 = vmax.f32 %v245, 0.0
  %v264 = vmax.f32 %v250, 0.0
  %v265 = vmax.f32 %v255, 0.0
  %v266 = vmax.f32 %v260, 0.0
  %v267 = vsub.f32 0.0, %v263
  %v268 = vsub.f32 0.0, %v264
  %v269 = vsub.f32 0.0, %v265
  %v270 = vsub.f32 0.0, %v266
  %v271 = vmul.f32 %v267, 1.442695
  %v272 = vpow.pop %v271
  %v273 = vmul.f32 %v268, 1.442695
  %v274 = vpow.pop %v273
  %v275 = vmul.f32 %v269, 1.442695
  %v276 = vpow.pop %v275
  %v277 = vmul.f32 %v270, 1.442695
  %v278 = vpow.pop %v277
  %vm279 = vcmask 261120
  %v281 = vsel %vm279, %v272, 0
  %v284 = vsel %vm279, %v274, 0
  %v287 = vsel %vm279, %v276, 0
  %v290 = vsel %vm279, %v278, 0
  %292 = vmatprep.subr.mxu0 0.0
  %293 = vmatpush1.msra.mxu0 %v150
  %294 = vmatprep.subr.mxu0 0.0
  %295 = vmatpush1.msra.mxu0 %v151
  %296 = vmatprep.subr.mxu0 0.0
  %297 = vmatpush1.msra.mxu0 %v152
  %298 = vmatprep.subr.mxu0 0.0
  %299 = vmatpush1.msra.mxu0 %v153
  %300 = vmatprep.subr.mxu0 0.0
  %301 = vmatpush1.msra.mxu0 0.0
  %302 = vmatprep.subr.mxu0 0.0
  %303 = vmatpush1.msra.mxu0 0.0
  %304 = vmatprep.subr.mxu0 0.0
  %305 = vmatpush1.msra.mxu0 0.0
  %306 = vmatprep.subr.mxu0 0.0
  %307 = vmatpush1.msra.mxu0 0.0
  %308 = vmatprep.subr.mxu0 0.0
  %309 = vmatpush1.msra.mxu0 0.0
  %310 = vmatprep.subr.mxu0 0.0
  %311 = vmatpush1.msra.mxu0 0.0
  %312 = vmatprep.subr.mxu0 0.0
  %313 = vmatpush1.msra.mxu0 0.0
  %314 = vmatprep.subr.mxu0 0.0
  %315 = vmatpush1.msra.mxu0 0.0
  %316 = vmatprep.subr.mxu0 0.0
  %317 = vmatpush1.msra.mxu0 0.0
  %318 = vmatprep.subr.mxu0 0.0
  %319 = vmatpush1.msra.mxu0 0.0
  %320 = vmatprep.subr.mxu0 0.0
  %321 = vmatpush1.msra.mxu0 0.0
  %322 = vmatprep.subr.mxu0 0.0
  %323 = vmatpush1.msra.mxu0 0.0
  %324 = vmatprep.subr.mxu0 0.0
  %325 = vmatpush1.msra.mxu0 0.0
  %326 = vmatprep.subr.mxu0 0.0
  %327 = vmatpush1.msra.mxu0 0.0
  %328 = vmatprep.subr.mxu0 0.0
  %329 = vmatpush1.msra.mxu0 0.0
  %330 = vmatprep.subr.mxu0 0.0
  %331 = vmatpush1.msra.mxu0 0.0
  %332 = vmatprep.subr.mxu0 0.0
  %333 = vmatpush1.msra.mxu0 0.0
  %334 = vmatprep.subr.mxu0 0.0
  %335 = vmatpush1.msra.mxu0 0.0
  %336 = vmatprep.subr.mxu0 0.0
  %337 = vmatpush1.msra.mxu0 0.0
  %338 = vmatprep.subr.mxu0 0.0
  %339 = vmatpush1.msra.mxu0 0.0
  %340 = vmatprep.subr.mxu0 0.0
  %341 = vmatpush1.msra.mxu0 0.0
  %342 = vmatprep.subr.mxu0 0.0
  %343 = vmatpush1.msra.mxu0 0.0
  %344 = vmatprep.subr.mxu0 0.0
  %345 = vmatpush1.msra.mxu0 0.0
  %346 = vmatprep.subr.mxu0 0.0
  %347 = vmatpush1.msra.mxu0 0.0
  %348 = vmatprep.subr.mxu0 0.0
  %349 = vmatpush1.msra.mxu0 0.0
  %350 = vmatprep.subr.mxu0 0.0
  %351 = vmatpush1.msra.mxu0 0.0
  %352 = vmatprep.subr.mxu0 0.0
  %353 = vmatpush1.msra.mxu0 0.0
  %354 = vmatprep.subr.mxu0 0.0
  %355 = vmatpush1.msra.mxu0 0.0
  %356 = vmatprep.mubr.f32.mxu0 0.0
  %357 = vmatmul.mubr.f32.gmra.mrb[0].mxu0 %v281
  %v358 = vpop.f32.mrb[0].mxu0
  %v359 = vadd.f32 0.0, %v358
  %v360 = vpop.f32.mrb[0].mxu0
  %361 = vmatprep.mubr.f32.mxu0 0.0
  %362 = vmatmul.mubr.f32.gmra.mrb[0].mxu0 %v284
  %v363 = vpop.f32.mrb[0].mxu0
  %v364 = vadd.f32 0.0, %v363
  %v365 = vpop.f32.mrb[0].mxu0
  %366 = vmatprep.mubr.f32.mxu0 0.0
  %367 = vmatmul.mubr.f32.gmra.mrb[0].mxu0 %v287
  %v368 = vpop.f32.mrb[0].mxu0
  %v369 = vadd.f32 0.0, %v368
  %v370 = vpop.f32.mrb[0].mxu0
  %371 = vmatprep.mubr.f32.mxu0 0.0
  %372 = vmatmul.mubr.f32.gmra.mrb[0].mxu0 %v290
  %v373 = vpop.f32.mrb[0].mxu0
  %v374 = vadd.f32 0.0, %v373
  %v375 = vpop.f32.mrb[0].mxu0
  %376 = vdwg.mxu0
  %vm377 = vcmask 130048
  %v379 = vsel %vm377, %v359, 0
  %v382 = vsel %vm377, %v364, 0
  %v385 = vsel %vm377, %v369, 0
  %v388 = vsel %vm377, %v374, 0
  %390 = vmatprep.subr.mxu0 0.0
  %391 = vmatpush1.msra.mxu0 %v24
  %392 = vmatprep.subr.mxu0 0.0
  %393 = vmatpush1.msra.mxu0 %v25
  %394 = vmatprep.subr.mxu0 0.0
  %395 = vmatpush1.msra.mxu0 0.0
  %396 = vmatprep.subr.mxu0 0.0
  %397 = vmatpush1.msra.mxu0 0.0
  %398 = vmatprep.subr.mxu0 0.0
  %399 = vmatpush1.msra.mxu0 0.0
  %400 = vmatprep.subr.mxu0 0.0
  %401 = vmatpush1.msra.mxu0 0.0
  %402 = vmatprep.subr.mxu0 0.0
  %403 = vmatpush1.msra.mxu0 0.0
  %404 = vmatprep.subr.mxu0 0.0
  %405 = vmatpush1.msra.mxu0 0.0
  %406 = vmatprep.subr.mxu0 0.0
  %407 = vmatpush1.msra.mxu0 0.0
  %408 = vmatprep.subr.mxu0 0.0
  %409 = vmatpush1.msra.mxu0 0.0
  %410 = vmatprep.subr.mxu0 0.0
  %411 = vmatpush1.msra.mxu0 0.0
  %412 = vmatprep.subr.mxu0 0.0
  %413 = vmatpush1.msra.mxu0 0.0
  %414 = vmatprep.subr.mxu0 0.0
  %415 = vmatpush1.msra.mxu0 0.0
  %416 = vmatprep.subr.mxu0 0.0
  %417 = vmatpush1.msra.mxu0 0.0
  %418 = vmatprep.subr.mxu0 0.0
  %419 = vmatpush1.msra.mxu0 0.0
  %420 = vmatprep.subr.mxu0 0.0
  %421 = vmatpush1.msra.mxu0 0.0
  %422 = vmatprep.subr.mxu0 0.0
  %423 = vmatpush1.msra.mxu0 0.0
  %424 = vmatprep.subr.mxu0 0.0
  %425 = vmatpush1.msra.mxu0 0.0
  %426 = vmatprep.subr.mxu0 0.0
  %427 = vmatpush1.msra.mxu0 0.0
  %428 = vmatprep.subr.mxu0 0.0
  %429 = vmatpush1.msra.mxu0 0.0
  %430 = vmatprep.subr.mxu0 0.0
  %431 = vmatpush1.msra.mxu0 0.0
  %432 = vmatprep.subr.mxu0 0.0
  %433 = vmatpush1.msra.mxu0 0.0
  %434 = vmatprep.subr.mxu0 0.0
  %435 = vmatpush1.msra.mxu0 0.0
  %436 = vmatprep.subr.mxu0 0.0
  %437 = vmatpush1.msra.mxu0 0.0
  %438 = vmatprep.subr.mxu0 0.0
  %439 = vmatpush1.msra.mxu0 0.0
  %440 = vmatprep.subr.mxu0 0.0
  %441 = vmatpush1.msra.mxu0 0.0
  %442 = vmatprep.subr.mxu0 0.0
  %443 = vmatpush1.msra.mxu0 0.0
  %444 = vmatprep.subr.mxu0 0.0
  %445 = vmatpush1.msra.mxu0 0.0
  %446 = vmatprep.subr.mxu0 0.0
  %447 = vmatpush1.msra.mxu0 0.0
  %448 = vmatprep.subr.mxu0 0.0
  %449 = vmatpush1.msra.mxu0 0.0
  %450 = vmatprep.subr.mxu0 0.0
  %451 = vmatpush1.msra.mxu0 0.0
  %452 = vmatprep.subr.mxu0 0.0
  %453 = vmatpush1.msra.mxu0 0.0
  %454 = vmatprep.mubr.f32.mxu0 0.0
  %455 = vmatmul.mubr.f32.gmra.mrb[0].mxu0 %v379
  %v456 = vpop.f32.mrb[0].mxu0
  %v457 = vadd.f32 0.0, %v456
  %v458 = vpop.f32.mrb[0].mxu0
  %459 = vmatprep.mubr.f32.mxu0 0.0
  %460 = vmatmul.mubr.f32.gmra.mrb[0].mxu0 %v382
  %v461 = vpop.f32.mrb[0].mxu0
  %v462 = vadd.f32 0.0, %v461
  %v463 = vpop.f32.mrb[0].mxu0
  %464 = vmatprep.mubr.f32.mxu0 0.0
  %465 = vmatmul.mubr.f32.gmra.mrb[0].mxu0 %v385
  %v466 = vpop.f32.mrb[0].mxu0
  %v467 = vadd.f32 0.0, %v466
  %v468 = vpop.f32.mrb[0].mxu0
  %469 = vmatprep.mubr.f32.mxu0 0.0
  %470 = vmatmul.mubr.f32.gmra.mrb[0].mxu0 %v388
  %v471 = vpop.f32.mrb[0].mxu0
  %v472 = vadd.f32 0.0, %v471
  %v473 = vpop.f32.mrb[0].mxu0
  %474 = vdwg.mxu0
  %v475 = vxor.u32 %v457, 2147483648
  %v476 = vxor.u32 %v462, 2147483648
  %v477 = vxor.u32 %v467, 2147483648
  %v478 = vxor.u32 %v472, 2147483648
  %v479 = vmul.f32 %v475, 1.442695
  %v480 = vpow.pop %v479
  %v481 = vmul.f32 %v476, 1.442695
  %v482 = vpow.pop %v481
  %v483 = vmul.f32 %v477, 1.442695
  %v484 = vpow.pop %v483
  %v485 = vmul.f32 %v478, 1.442695
  %v486 = vpow.pop %v485
  %v487 = vadd.f32 %v480, 1.0
  %v488 = vadd.f32 %v482, 1.0
  %v489 = vadd.f32 %v484, 1.0
  %v490 = vadd.f32 %v486, 1.0
  %v491 = vrcp.pop %v487
  %v492 = vmul.f32 1.0, %v491
  %v493 = vrcp.pop %v488
  %v494 = vmul.f32 1.0, %v493
  %v495 = vrcp.pop %v489
  %v496 = vmul.f32 1.0, %v495
  %v497 = vrcp.pop %v490
  %v498 = vmul.f32 1.0, %v497
  %v499 = vmul.f32 %v457, %v492
  %v500 = vmul.f32 %v462, %v494
  %v501 = vmul.f32 %v467, %v496
  %v502 = vmul.f32 %v472, %v498
  %v504 = vsel %vm377, %v499, 0
  %v507 = vsel %vm377, %v500, 0
  %v510 = vsel %vm377, %v501, 0
  %v513 = vsel %vm377, %v502, 0
  %515 = vmatprep.subr.mxu0 0.0
  %516 = vmatpush1.msra.mxu0 %v26
  %517 = vmatprep.subr.mxu0 0.0
  %518 = vmatpush1.msra.mxu0 %v27
  %519 = vmatprep.subr.mxu0 0.0
  %520 = vmatpush1.msra.mxu0 0.0
  %521 = vmatprep.subr.mxu0 0.0
  %522 = vmatpush1.msra.mxu0 0.0
  %523 = vmatprep.subr.mxu0 0.0
  %524 = vmatpush1.msra.mxu0 0.0
  %525 = vmatprep.subr.mxu0 0.0
  %526 = vmatpush1.msra.mxu0 0.0
  %527 = vmatprep.subr.mxu0 0.0
  %528 = vmatpush1.msra.mxu0 0.0
  %529 = vmatprep.subr.mxu0 0.0
  %530 = vmatpush1.msra.mxu0 0.0
  %531 = vmatprep.subr.mxu0 0.0
  %532 = vmatpush1.msra.mxu0 0.0
  %533 = vmatprep.subr.mxu0 0.0
  %534 = vmatpush1.msra.mxu0 0.0
  %535 = vmatprep.subr.mxu0 0.0
  %536 = vmatpush1.msra.mxu0 0.0
  %537 = vmatprep.subr.mxu0 0.0
  %538 = vmatpush1.msra.mxu0 0.0
  %539 = vmatprep.subr.mxu0 0.0
  %540 = vmatpush1.msra.mxu0 0.0
  %541 = vmatprep.subr.mxu0 0.0
  %542 = vmatpush1.msra.mxu0 0.0
  %543 = vmatprep.subr.mxu0 0.0
  %544 = vmatpush1.msra.mxu0 0.0
  %545 = vmatprep.subr.mxu0 0.0
  %546 = vmatpush1.msra.mxu0 0.0
  %547 = vmatprep.subr.mxu0 0.0
  %548 = vmatpush1.msra.mxu0 0.0
  %549 = vmatprep.subr.mxu0 0.0
  %550 = vmatpush1.msra.mxu0 0.0
  %551 = vmatprep.subr.mxu0 0.0
  %552 = vmatpush1.msra.mxu0 0.0
  %553 = vmatprep.subr.mxu0 0.0
  %554 = vmatpush1.msra.mxu0 0.0
  %555 = vmatprep.subr.mxu0 0.0
  %556 = vmatpush1.msra.mxu0 0.0
  %557 = vmatprep.subr.mxu0 0.0
  %558 = vmatpush1.msra.mxu0 0.0
  %559 = vmatprep.subr.mxu0 0.0
  %560 = vmatpush1.msra.mxu0 0.0
  %561 = vmatprep.subr.mxu0 0.0
  %562 = vmatpush1.msra.mxu0 0.0
  %563 = vmatprep.subr.mxu0 0.0
  %564 = vmatpush1.msra.mxu0 0.0
  %565 = vmatprep.subr.mxu0 0.0
  %566 = vmatpush1.msra.mxu0 0.0
  %567 = vmatprep.subr.mxu0 0.0
  %568 = vmatpush1.msra.mxu0 0.0
  %569 = vmatprep.subr.mxu0 0.0
  %570 = vmatpush1.msra.mxu0 0.0
  %571 = vmatprep.subr.mxu0 0.0
  %572 = vmatpush1.msra.mxu0 0.0
  %573 = vmatprep.subr.mxu0 0.0
  %574 = vmatpush1.msra.mxu0 0.0
  %575 = vmatprep.subr.mxu0 0.0
  %576 = vmatpush1.msra.mxu0 0.0
  %577 = vmatprep.subr.mxu0 0.0
  %578 = vmatpush1.msra.mxu0 0.0
  %579 = vmatprep.mubr.f32.mxu0 0.0
  %580 = vmatmul.mubr.f32.gmra.mrb[0].mxu0 %v504
  %v581 = vpop.f32.mrb[0].mxu0
  %v582 = vadd.f32 0.0, %v581
  %v583 = vpop.f32.mrb[0].mxu0
  %584 = vmatprep.mubr.f32.mxu0 0.0
  %585 = vmatmul.mubr.f32.gmra.mrb[0].mxu0 %v507
  %v586 = vpop.f32.mrb[0].mxu0
  %v587 = vadd.f32 0.0, %v586
  %v588 = vpop.f32.mrb[0].mxu0
  %589 = vmatprep.mubr.f32.mxu0 0.0
  %590 = vmatmul.mubr.f32.gmra.mrb[0].mxu0 %v510
  %v591 = vpop.f32.mrb[0].mxu0
  %v592 = vadd.f32 0.0, %v591
  %v593 = vpop.f32.mrb[0].mxu0
  %594 = vmatprep.mubr.f32.mxu0 0.0
  %595 = vmatmul.mubr.f32.gmra.mrb[0].mxu0 %v513
  %v596 = vpop.f32.mrb[0].mxu0
  %v597 = vadd.f32 0.0, %v596
  %v598 = vpop.f32.mrb[0].mxu0
  %599 = vdwg.mxu0
  %v600 = vxor.u32 %v582, 2147483648
  %v601 = vxor.u32 %v587, 2147483648
  %v602 = vxor.u32 %v592, 2147483648
  %v603 = vxor.u32 %v597, 2147483648
  %v604 = vmul.f32 %v600, 1.442695
  %v605 = vpow.pop %v604
  %v606 = vmul.f32 %v601, 1.442695
  %v607 = vpow.pop %v606
  %v608 = vmul.f32 %v602, 1.442695
  %v609 = vpow.pop %v608
  %v610 = vmul.f32 %v603, 1.442695
  %v611 = vpow.pop %v610
  %v612 = vadd.f32 %v605, 1.0
  %v613 = vadd.f32 %v607, 1.0
  %v614 = vadd.f32 %v609, 1.0
  %v615 = vadd.f32 %v611, 1.0
  %v616 = vrcp.pop %v612
  %v617 = vmul.f32 1.0, %v616
  %v618 = vrcp.pop %v613
  %v619 = vmul.f32 1.0, %v618
  %v620 = vrcp.pop %v614
  %v621 = vmul.f32 1.0, %v620
  %v622 = vrcp.pop %v615
  %v623 = vmul.f32 1.0, %v622
  %v624 = vmul.f32 %v582, %v617
  %v625 = vmul.f32 %v587, %v619
  %v626 = vmul.f32 %v592, %v621
  %v627 = vmul.f32 %v597, %v623
  %628 = vst [vmem:[%s2] sm:$0xff] %v624
  %629 = vst [vmem:[%s2 + $0x8] sm:$0xff] %v625
  %630 = vst [vmem:[%s2 + $0x10] sm:$0xff] %v626
  %631 = vst [vmem:[%s2 + $0x18] sm:$0xff] %v627
  // Predicated region
  $region10: #{depthwise_conv_parity.1} parent=0 // pred_check
    _
  $region11: #{depthwise_conv_parity.1} parent=0 // pred_check_branch
    %633 = sbr.rel (0) target = $region13
  $region12: #{depthwise_conv_parity.1} parent=0 // pred_region
    _
  $region13: #{depthwise_conv_parity.1} parent=0 // pred_fallthru
    _
  // Predicated region
  $region14: #{depthwise_conv_parity.1} parent=0 // pred_check
    _
  $region15: #{depthwise_conv_parity.1} parent=0 // pred_check_branch
    %635 = sbr.rel (0) target = $region17
  $region16: #{depthwise_conv_parity.1} parent=0 // pred_region
    _
  $region17: #{depthwise_conv_parity.1} parent=0 // pred_fallthru
    _

</llo_original>
